<compile_context>
chip_gen: v5e
topology: v5e:2x2
jax: 0.10.0
libtpu: 0.0.40
codegen_flags: <defaults>
</compile_context>

<pallas_src>
import functools

import jax
import jax.numpy as jnp
from jax.experimental import pallas as pl
from jax.experimental.pallas import tpu as pltpu


def _conv_norm_act_kernel(xa_ref, xb_ref, w_ref, scale_ref, shift_ref, o_ref,
                          slab_ref, *, shifts, tq, cin_p):
    """One (batch n, Cout-tile co, spatial-tile q) grid step.

    xa_ref:   (1, Cin_p, tq)   current flattened-input tile (bf16)
    xb_ref:   (1, Cin_p, HB)   small halo block right after the tile (bf16)
    w_ref:    (tco, T*Cin_p)   tap-fused weights for this Cout tile (bf16)
    scale_ref, shift_ref: (tco, 1) folded BN affine (+ conv bias), f32
    o_ref:    (1, tco, tq)     NCHW-ordered, lane-dense output tile
    slab_ref: (T*Cin_p, tq)    VMEM im2col slab scratch (bf16)
    """
    # Current tile plus the small halo, contiguous along the lane axis.
    win = jnp.concatenate([xa_ref[0], xb_ref[0]], axis=-1)       # (Cin_p, tq+HB)
    # Fused im2col: each tap's shifted window goes into the slab at a
    # tile-aligned sublane offset (Cin_p is a multiple of 16 for bf16 packing).
    for t, d in enumerate(shifts):
        slab_ref[t * cin_p:(t + 1) * cin_p, :] = win[:, d:d + tq]
    # One MXU contraction with K = kh*kw*Cin_p instead of kh*kw dots of K=Cin_p.
    acc = jnp.dot(w_ref[...], slab_ref[...],
                  preferred_element_type=jnp.float32)            # (tco, tq) f32
    # Epilogue: BatchNorm2d(eval) affine (conv bias folded into shift) + ReLU.
    acc = acc * scale_ref[...] + shift_ref[...]
    o_ref[0] = jnp.maximum(acc, 0.0).astype(o_ref.dtype)


def conv_norm_act(x_nchw, weight, bias, gamma, beta, run_mean, run_var,
                  *, stride=1, padding=1, dilation=1, groups=1,
                  eps=1e-5, tq=None, out_dtype=None):
    """ConvNormAct forward. x_nchw: (N, Cin, H, W); weight: (Cout, Cin, kh, kw)."""
    N, Cin, H, W = x_nchw.shape
    Cout, Cin_w, kh, kw = weight.shape
    assert stride == 1 and groups == 1 and Cin_w == Cin, \
        "fused kernel implements the stride=1, groups=1 path"
    # TODO(synk): stride>1 / groups>1 need a different shifted-window scheme.

    out_dtype = x_nchw.dtype if out_dtype is None else out_dtype
    out_bytes = jnp.dtype(out_dtype).itemsize

    Hp, Wp = H + 2 * padding, W + 2 * padding
    OH = Hp - dilation * (kh - 1)
    OW = Wp - dilation * (kw - 1)
    T = kh * kw
    halo = dilation * ((kh - 1) * Wp + (kw - 1))
    HB = max(128, -(-halo // 128) * 128)          # halo block width (lanes)

    # Channel padding: Cin to a multiple of 16 (bf16 sublane packing -> aligned
    # slab stores); Cout to the sublane granularity, tiled in tco-row slabs.
    Cin_p = -(-Cin // 16) * 16
    c_align = 16 if out_bytes < 4 else 8
    Cout_p = -(-Cout // c_align) * c_align
    tco = min(Cout_p, 128)                        # bounds weights / dot result
    Cout_p = -(-Cout_p // tco) * tco
    n_co = Cout_p // tco
    K_f = T * Cin_p

    # Spatial (lane) tile: multiple of HB (so the halo block index is exact) and
    # as large as covers the image — v5e/v6e are single-TC, bigger tiles win.
    if tq is None:
        tq = 1024
    tq = max(HB, (tq // HB) * HB)
    tq = min(tq, -(-(OH * Wp) // HB) * HB)
    n_q = -(-(OH * Wp) // tq)
    # v7x has two TensorCores: prefer an even total step count for balance.
    if (N * n_co * n_q) % 2 == 1 and tq >= 2 * HB:
        tq = max(HB, (tq // (2 * HB)) * HB)
        n_q = -(-(OH * Wp) // tq)
    assert tq % HB == 0 and HB >= halo, (tq, HB, halo)

    Qout = n_q * tq
    # Input flat length must cover Qout + one halo block; fold the tail padding
    # into extra bottom rows so the host glue is ONE pad + reshape + cast.
    extra_rows = max(0, -(-(Qout + HB - Hp * Wp) // Wp))
    Hp_ext = Hp + extra_rows
    L = Hp_ext * Wp

    xf = jnp.pad(x_nchw.astype(jnp.bfloat16),
                 ((0, 0), (0, Cin_p - Cin),
                  (padding, padding + extra_rows), (padding, padding)))
    xf = xf.reshape(N, Cin_p, L)

    # Tap-fused weights: (Cout_p, T*Cin_p), row k = (tap t, cin) — matches the
    # slab layout built in the kernel.  bf16 for the MXU.
    w_f = jnp.transpose(weight, (0, 2, 3, 1))                    # (Cout, kh, kw, Cin)
    w_f = jnp.pad(w_f, ((0, Cout_p - Cout), (0, 0), (0, 0), (0, Cin_p - Cin)))
    w_f = w_f.reshape(Cout_p, K_f).astype(jnp.bfloat16)
    shifts = tuple(dilation * (i * Wp + j) for i in range(kh) for j in range(kw))

    # BatchNorm2d (eval) folds to per-channel affine; conv bias folds into shift.
    scale = (gamma / jnp.sqrt(run_var + eps)).astype(jnp.float32)
    shift = (beta - run_mean * scale).astype(jnp.float32)
    if bias is not None:
        shift = shift + bias.astype(jnp.float32) * scale
    scale2 = jnp.pad(scale, (0, Cout_p - Cout)).reshape(Cout_p, 1)
    shift2 = jnp.pad(shift, (0, Cout_p - Cout)).reshape(Cout_p, 1)

    # VMEM budget: double-buffered pipeline streams + slab + f32 dot result;
    # capped at 48 MiB to leave Mosaic headroom on v7x (64 MiB physical).
    vmem_bytes = (2 * Cin_p * tq * 2            # xa stream (bf16, 2 buffers)
                  + 2 * Cin_p * HB * 2          # halo stream
                  + 2 * tco * K_f * 2           # weight tile
                  + 4 * tco * 4                 # scale + shift
                  + 2 * tco * tq * out_bytes    # output tile
                  + K_f * tq * 2                # im2col slab scratch
                  + tco * tq * 4)               # f32 dot result / epilogue
    vmem_limit = int(min(48 * 1024 * 1024,
                         max(16 * 1024 * 1024, 2 * vmem_bytes)))

    kernel = functools.partial(_conv_norm_act_kernel,
                               shifts=shifts, tq=tq, cin_p=Cin_p)

    out = pl.pallas_call(
        kernel,
        out_shape=jax.ShapeDtypeStruct((N, Cout_p, Qout), out_dtype),
        grid_spec=pltpu.PrefetchScalarGridSpec(
            num_scalar_prefetch=0,
            grid=(N, n_co, n_q),
            in_specs=[
                pl.BlockSpec((1, Cin_p, tq),
                             lambda n, co, q: (n, 0, q)),                      # tile q
                pl.BlockSpec((1, Cin_p, HB),
                             lambda n, co, q: (n, 0, (q + 1) * (tq // HB))),   # halo
                pl.BlockSpec((tco, K_f), lambda n, co, q: (co, 0)),            # weights
                pl.BlockSpec((tco, 1), lambda n, co, q: (co, 0)),              # BN scale
                pl.BlockSpec((tco, 1), lambda n, co, q: (co, 0)),              # BN shift+bias
            ],
            out_specs=pl.BlockSpec((1, tco, tq), lambda n, co, q: (n, co, q)),
            scratch_shapes=[pltpu.VMEM((K_f, tq), jnp.bfloat16)],
        ),
        compiler_params=pltpu.CompilerParams(
            dimension_semantics=("parallel", "parallel", "parallel"),
            vmem_limit_bytes=vmem_limit),
        cost_estimate=pl.CostEstimate(
            flops=2 * N * Cout_p * Qout * K_f,
            transcendentals=0,
            bytes_accessed=int(N * Cin_p * (Qout + n_q * HB) * 2
                               + N * Cout_p * K_f * 2
                               + N * Cout_p * Qout * out_bytes)),
    )(xf, xf, w_f, scale2, shift2)

    # Valid region: flattened position q = oh*Wp + ow  ->  NCHW directly.
    # (Wp-OW padded columns per row + the padded tail are sliced off here.)
    out = out[:, :Cout, :OH * Wp].reshape(N, Cout, OH, Wp)[:, :, :, :OW]
    return out


def _reference(x, weight, bias, gamma, beta, run_mean, run_var,
               *, stride, padding, dilation=1, eps=1e-5):
    y = jax.lax.conv_general_dilated(
        x, weight, window_strides=(stride, stride),
        padding=((padding, padding), (padding, padding)),
        rhs_dilation=(dilation, dilation),
        dimension_numbers=("NCHW", "OIHW", "NCHW"),
        precision=jax.lax.Precision.HIGHEST)
    y = y + bias[None, :, None, None]
    scale = gamma / jnp.sqrt(run_var + eps)
    shift = beta - run_mean * scale
    y = y * scale[None, :, None, None] + shift[None, :, None, None]
    return jnp.maximum(y, 0.0)


if __name__ == "__main__":
    # ConvNormAct(in_channels=4, out_channels=8, kernel_size=3, stride=1,
    #             padding=1, bias=True, norm_layer=BatchNorm2d(eval), activation=ReLU)
    N, Cin, H, W = 2, 4, 16, 16
    Cout, ksz, stride, padding = 8, 3, 1, 1

    key = jax.random.PRNGKey(0)
    kx, kw_, kb, kg, kbt, km, kv = jax.random.split(key, 7)
    x = jax.random.normal(kx, (N, Cin, H, W), dtype=jnp.float32)
    weight = 0.1 * jax.random.normal(kw_, (Cout, Cin, ksz, ksz), dtype=jnp.float32)
    bias = 0.1 * jax.random.normal(kb, (Cout,), dtype=jnp.float32)
    gamma = 1.0 + 0.05 * jax.random.normal(kg, (Cout,), dtype=jnp.float32)
    beta = 0.05 * jax.random.normal(kbt, (Cout,), dtype=jnp.float32)
    run_mean = 0.05 * jax.random.normal(km, (Cout,), dtype=jnp.float32)
    run_var = jnp.abs(1.0 + 0.05 * jax.random.normal(kv, (Cout,), dtype=jnp.float32))

    out = conv_norm_act(x, weight, bias, gamma, beta, run_mean, run_var,
                        stride=stride, padding=padding)
    out = jax.block_until_ready(out)

    ref = _reference(x, weight, bias, gamma, beta, run_mean, run_var,
                     stride=stride, padding=padding)
    assert out.shape == (N, Cout, H, W), out.shape
    err = float(jnp.max(jnp.abs(out - ref)))
    # bf16 matmul inputs with f32 accumulation -> expect ~1e-3 abs error.
    assert jnp.allclose(out, ref, atol=2e-2, rtol=2e-2), err
    print("KERNEL_OK")
</pallas_src>

<mosaic_0001>
module attributes {stable_mosaic.version = 11 : i64} {
  func.func @_conv_norm_act_kernel(%arg0: i32, %arg1: i32, %arg2: i32, %arg3: memref<1x16x384xbf16, #tpu.memory_space<vmem>>, %arg4: memref<1x16x128xbf16, #tpu.memory_space<vmem>>, %arg5: memref<8x144xbf16, #tpu.memory_space<vmem>>, %arg6: memref<8x1xf32, #tpu.memory_space<vmem>>, %arg7: memref<8x1xf32, #tpu.memory_space<vmem>>, %arg8: memref<1x8x384xf32, #tpu.memory_space<vmem>>, %arg9: memref<144x384xbf16, #tpu.memory_space<vmem>>) attributes {dimension_semantics = [#tpu.dimension_semantics<parallel>, #tpu.dimension_semantics<parallel>, #tpu.dimension_semantics<parallel>], iteration_bounds = array<i64: 2, 1, 1>, scalar_prefetch = 0 : i64, scratch_operands = 1 : i64, tpu.core_type = #tpu.core_type<tc>, window_params = [{transform_indices = @transform_0, window_bounds = array<i64: 1, 16, 384>}, {transform_indices = @transform_1, window_bounds = array<i64: 1, 16, 128>}, {transform_indices = @transform_2, window_bounds = array<i64: 8, 144>}, {transform_indices = @transform_3, window_bounds = array<i64: 8, 1>}, {transform_indices = @transform_4, window_bounds = array<i64: 8, 1>}, {transform_indices = @transform_5, window_bounds = array<i64: 1, 8, 384>}]} {
    %c0 = arith.constant 0 : index
    %c0_0 = arith.constant 0 : index
    %c0_1 = arith.constant 0 : index
    %0 = vector.load %arg3[%c0, %c0_0, %c0_1] : memref<1x16x384xbf16, #tpu.memory_space<vmem>>, vector<1x16x384xbf16>
    %1 = vector.shape_cast %0 : vector<1x16x384xbf16> to vector<16x384xbf16>
    %c0_2 = arith.constant 0 : index
    %c0_3 = arith.constant 0 : index
    %c0_4 = arith.constant 0 : index
    %2 = vector.load %arg4[%c0_2, %c0_3, %c0_4] : memref<1x16x128xbf16, #tpu.memory_space<vmem>>, vector<1x16x128xbf16>
    %3 = vector.shape_cast %2 : vector<1x16x128xbf16> to vector<16x128xbf16>
    %4 = tpu.concatenate %1, %3 in 1 : vector<16x384xbf16>, vector<16x128xbf16> -> vector<16x512xbf16>
    %5 = vector.extract_strided_slice %4 {offsets = [0, 0], sizes = [16, 384], strides = [1, 1]} : vector<16x512xbf16> to vector<16x384xbf16>
    %c0_5 = arith.constant 0 : index
    %c0_6 = arith.constant 0 : index
    %6 = vector.load %arg9[%c0_5, %c0_6] : memref<144x384xbf16, #tpu.memory_space<vmem>>, vector<16x384xbf16>
    tpu.vector_store %arg9[%c0_5, %c0_6], %5 {strides = array<i32>} : memref<144x384xbf16, #tpu.memory_space<vmem>>, vector<16x384xbf16>,
    %7 = vector.extract_strided_slice %4 {offsets = [0, 1], sizes = [16, 384], strides = [1, 1]} : vector<16x512xbf16> to vector<16x384xbf16>
    %c16 = arith.constant 16 : index
    %c0_7 = arith.constant 0 : index
    %8 = vector.load %arg9[%c16, %c0_7] : memref<144x384xbf16, #tpu.memory_space<vmem>>, vector<16x384xbf16>
    tpu.vector_store %arg9[%c16, %c0_7], %7 {strides = array<i32>} : memref<144x384xbf16, #tpu.memory_space<vmem>>, vector<16x384xbf16>,
    %9 = vector.extract_strided_slice %4 {offsets = [0, 2], sizes = [16, 384], strides = [1, 1]} : vector<16x512xbf16> to vector<16x384xbf16>
    %c32 = arith.constant 32 : index
    %c0_8 = arith.constant 0 : index
    %10 = vector.load %arg9[%c32, %c0_8] : memref<144x384xbf16, #tpu.memory_space<vmem>>, vector<16x384xbf16>
    tpu.vector_store %arg9[%c32, %c0_8], %9 {strides = array<i32>} : memref<144x384xbf16, #tpu.memory_space<vmem>>, vector<16x384xbf16>,
    %11 = vector.extract_strided_slice %4 {offsets = [0, 18], sizes = [16, 384], strides = [1, 1]} : vector<16x512xbf16> to vector<16x384xbf16>
    %c48 = arith.constant 48 : index
    %c0_9 = arith.constant 0 : index
    %12 = vector.load %arg9[%c48, %c0_9] : memref<144x384xbf16, #tpu.memory_space<vmem>>, vector<16x384xbf16>
    tpu.vector_store %arg9[%c48, %c0_9], %11 {strides = array<i32>} : memref<144x384xbf16, #tpu.memory_space<vmem>>, vector<16x384xbf16>,
    %13 = vector.extract_strided_slice %4 {offsets = [0, 19], sizes = [16, 384], strides = [1, 1]} : vector<16x512xbf16> to vector<16x384xbf16>
    %c64 = arith.constant 64 : index
    %c0_10 = arith.constant 0 : index
    %14 = vector.load %arg9[%c64, %c0_10] : memref<144x384xbf16, #tpu.memory_space<vmem>>, vector<16x384xbf16>
    tpu.vector_store %arg9[%c64, %c0_10], %13 {strides = array<i32>} : memref<144x384xbf16, #tpu.memory_space<vmem>>, vector<16x384xbf16>,
    %15 = vector.extract_strided_slice %4 {offsets = [0, 20], sizes = [16, 384], strides = [1, 1]} : vector<16x512xbf16> to vector<16x384xbf16>
    %c80 = arith.constant 80 : index
    %c0_11 = arith.constant 0 : index
    %16 = vector.load %arg9[%c80, %c0_11] : memref<144x384xbf16, #tpu.memory_space<vmem>>, vector<16x384xbf16>
    tpu.vector_store %arg9[%c80, %c0_11], %15 {strides = array<i32>} : memref<144x384xbf16, #tpu.memory_space<vmem>>, vector<16x384xbf16>,
    %17 = vector.extract_strided_slice %4 {offsets = [0, 36], sizes = [16, 384], strides = [1, 1]} : vector<16x512xbf16> to vector<16x384xbf16>
    %c96 = arith.constant 96 : index
    %c0_12 = arith.constant 0 : index
    %18 = vector.load %arg9[%c96, %c0_12] : memref<144x384xbf16, #tpu.memory_space<vmem>>, vector<16x384xbf16>
    tpu.vector_store %arg9[%c96, %c0_12], %17 {strides = array<i32>} : memref<144x384xbf16, #tpu.memory_space<vmem>>, vector<16x384xbf16>,
    %19 = vector.extract_strided_slice %4 {offsets = [0, 37], sizes = [16, 384], strides = [1, 1]} : vector<16x512xbf16> to vector<16x384xbf16>
    %c112 = arith.constant 112 : index
    %c0_13 = arith.constant 0 : index
    %20 = vector.load %arg9[%c112, %c0_13] : memref<144x384xbf16, #tpu.memory_space<vmem>>, vector<16x384xbf16>
    tpu.vector_store %arg9[%c112, %c0_13], %19 {strides = array<i32>} : memref<144x384xbf16, #tpu.memory_space<vmem>>, vector<16x384xbf16>,
    %21 = vector.extract_strided_slice %4 {offsets = [0, 38], sizes = [16, 384], strides = [1, 1]} : vector<16x512xbf16> to vector<16x384xbf16>
    %c128 = arith.constant 128 : index
    %c0_14 = arith.constant 0 : index
    %22 = vector.load %arg9[%c128, %c0_14] : memref<144x384xbf16, #tpu.memory_space<vmem>>, vector<16x384xbf16>
    tpu.vector_store %arg9[%c128, %c0_14], %21 {strides = array<i32>} : memref<144x384xbf16, #tpu.memory_space<vmem>>, vector<16x384xbf16>,
    %c0_15 = arith.constant 0 : index
    %c0_16 = arith.constant 0 : index
    %23 = vector.load %arg5[%c0_15, %c0_16] : memref<8x144xbf16, #tpu.memory_space<vmem>>, vector<8x144xbf16>
    %c0_17 = arith.constant 0 : index
    %c0_18 = arith.constant 0 : index
    %24 = vector.load %arg9[%c0_17, %c0_18] : memref<144x384xbf16, #tpu.memory_space<vmem>>, vector<144x384xbf16>
    %cst = arith.constant dense<0.000000e+00> : vector<8x384xf32>
    %25 = tpu.matmul %23, %24, %cst {dimension_numbers = #tpu.dot_dimension_numbers<[1], [0], [0], [1], [0, 0, 1, 1], [], []>} : vector<8x144xbf16>, vector<144x384xbf16>, vector<8x384xf32> -> vector<8x384xf32>
    %c0_19 = arith.constant 0 : index
    %c0_20 = arith.constant 0 : index
    %26 = vector.load %arg6[%c0_19, %c0_20] : memref<8x1xf32, #tpu.memory_space<vmem>>, vector<8x1xf32>
    %27 = vector.broadcast %26 : vector<8x1xf32> to vector<8x384xf32>
    %28 = arith.mulf %25, %27 : vector<8x384xf32>
    %c0_21 = arith.constant 0 : index
    %c0_22 = arith.constant 0 : index
    %29 = vector.load %arg7[%c0_21, %c0_22] : memref<8x1xf32, #tpu.memory_space<vmem>>, vector<8x1xf32>
    %30 = vector.broadcast %29 : vector<8x1xf32> to vector<8x384xf32>
    %31 = arith.addf %28, %30 : vector<8x384xf32>
    %cst_23 = arith.constant 0.000000e+00 : f32
    %32 = vector.broadcast %cst_23 : f32 to vector<8x384xf32>
    %33 = arith.maximumf %31, %32 : vector<8x384xf32>
    %c0_24 = arith.constant 0 : index
    %c0_25 = arith.constant 0 : index
    %c0_26 = arith.constant 0 : index
    %34 = vector.load %arg8[%c0_24, %c0_25, %c0_26] : memref<1x8x384xf32, #tpu.memory_space<vmem>>, vector<1x8x384xf32>
    %35 = vector.shape_cast %34 : vector<1x8x384xf32> to vector<8x384xf32>
    %36 = vector.shape_cast %33 : vector<8x384xf32> to vector<1x8x384xf32>
    tpu.vector_store %arg8[%c0_24, %c0_25, %c0_26], %36 {strides = array<i32>} : memref<1x8x384xf32, #tpu.memory_space<vmem>>, vector<1x8x384xf32>,
    return
  }
  func.func @transform_0(%arg0: i32, %arg1: i32, %arg2: i32) -> (i32, i32, i32) {
    %c0_i32 = arith.constant 0 : i32
    %c0_i32_0 = arith.constant 0 : i32
    return %arg0, %c0_i32, %arg2 : i32, i32, i32
  }
  func.func @transform_1(%arg0: i32, %arg1: i32, %arg2: i32) -> (i32, i32, i32) {
    %c1_i32 = arith.constant 1 : i32
    %0 = arith.addi %arg2, %c1_i32 : i32
    %c3_i32 = arith.constant 3 : i32
    %1 = arith.muli %0, %c3_i32 : i32
    %c0_i32 = arith.constant 0 : i32
    %c0_i32_0 = arith.constant 0 : i32
    return %arg0, %c0_i32, %1 : i32, i32, i32
  }
  func.func @transform_2(%arg0: i32, %arg1: i32, %arg2: i32) -> (i32, i32) {
    %c0_i32 = arith.constant 0 : i32
    %c0_i32_0 = arith.constant 0 : i32
    return %arg1, %c0_i32 : i32, i32
  }
  func.func @transform_3(%arg0: i32, %arg1: i32, %arg2: i32) -> (i32, i32) {
    %c0_i32 = arith.constant 0 : i32
    %c0_i32_0 = arith.constant 0 : i32
    return %arg1, %c0_i32 : i32, i32
  }
  func.func @transform_4(%arg0: i32, %arg1: i32, %arg2: i32) -> (i32, i32) {
    %c0_i32 = arith.constant 0 : i32
    %c0_i32_0 = arith.constant 0 : i32
    return %arg1, %c0_i32 : i32, i32
  }
  func.func @transform_5(%arg0: i32, %arg1: i32, %arg2: i32) -> (i32, i32, i32) {
    %c0_i32 = arith.constant 0 : i32
    return %arg0, %arg1, %arg2 : i32, i32, i32
  }
}

</mosaic_0001>

<llo_original>
// kernel: tpu_custom_call.1
$region0: #{tpu_custom_call.1}
  #allocation0 [shape = 'u32[]', space=smem, size = 0x4, offset = 0x4, fixed_abs, tag = 'smem constant byte address 0x4 - core index']
  #allocation1 [shape = 'u32[72,128]{1,0:T(1,128)}', space=vmem, size = 0x9000, scoped, tag = 'internal scratch']
  #allocation2 [shape = 'bf16[144,384]{1,0:T(8,128)(2,1)}', space=vmem, size = 0x1b000, scoped, tag = 'scratch operand']
  %s0 = inlined_call_operand.hbm [shape: bf16[2,16,522], index: 0, kind: input, shape index: {}]
  %s1 = inlined_call_operand.hbm [shape: bf16[2,16,522], index: 1, kind: input, shape index: {}]
  %s2 = inlined_call_operand.vmem [shape: bf16[8,144], index: 2, kind: input, shape index: {}]
  %s3 = inlined_call_operand.vmem [shape: f32[8,1], index: 3, kind: input, shape index: {}]
  %s4 = inlined_call_operand.vmem [shape: f32[8,1], index: 4, kind: input, shape index: {}]
  %s5 = inlined_call_operand.hbm [shape: f32[2,8,384], index: 5, kind: output, shape index: {}]
  %s6 = sld [smem:[#allocation0]]
  $region61: #{tpu_custom_call.1} parent=0
    _
  %s8 = ssub.s32 1, %s6
  %s9 = scalar_select 0, %s8, %s6
  $region1: #{tpu_custom_call.1} parent=0
    #allocation3 [shape = 'u8[24576]{0}', space=vmem, size = 0x6000, scoped, tag = 'input window, operand 0']
    #allocation4 [shape = 's32[2]{0}', space=sflag, size = 0x8, scoped, tag = 'scoped memory for tpu_custom_call.1']
    #allocation5 [shape = 's32[2]{0}', space=sflag, size = 0x8, scoped, tag = 'scoped memory for tpu_custom_call.1']
    #allocation6 [shape = 'u8[8192]{0}', space=vmem, size = 0x2000, scoped, tag = 'input window, operand 1']
    #allocation7 [shape = 's32[2]{0}', space=sflag, size = 0x8, scoped, tag = 'scoped memory for tpu_custom_call.1']
    #allocation8 [shape = 'u8[24576]{0}', space=vmem, size = 0x6000, scoped, tag = 'output window, operand 0']
    %10 = vsyncpa [#allocation4], 0
    %s11 = scalar_lea.sflag [#allocation4], 1
    %12 = vsyncpa %s11, 0
    %13 = vsyncpa [#allocation7], 0
    %s14 = scalar_lea.sflag [#allocation7], 1
    %15 = vsyncpa %s14, 0
    %16 = vsyncpa [#allocation5], 0
    %s17 = scalar_lea.sflag [#allocation5], 1
    %18 = vsyncpa %s17, 0
    loop: start=0, step=1, limit=4
    $region2: #{tpu_custom_call.1} parent=1 // loop_pre_header
      _
    $region3: #{tpu_custom_call.1} parent=1 // loop_header
      %s20 = sphi 0, %s24
      %p21 = scmp.ge.s32.totalorder %s20, 4
      %s27 = sphi 0, %s46
      %s28 = sphi 0, %s42
      %s29 = sphi 0, %s38
      %s30 = sphi 0, %s27
      %s31 = sphi 0, %s28
      %s32 = sphi 0, %s29
      %s33 = sphi 0, %s30
      %s34 = sphi 0, %s31
      %s35 = sphi 0, %s32
      %s51 = sphi 0, %s53
      %s54 = sphi 0, %s51
      %s55 = sphi 0, %s54
      %s71 = sphi 0, %s55
      %s83 = sphi 0, %s85
      %s86 = sphi 0, %s83
      %s87 = sphi 0, %s86
      %s103 = sphi 0, %s87
      %s109 = sphi 0, %s111
      %s112 = sphi 0, %s109
      %s113 = sphi 0, %s112
      %s129 = sphi 0, %s113
      %s135 = sphi 0, %s137
      %s138 = sphi 0, %s135
      %s139 = sphi 0, %s138
      %s155 = sphi 0, %s139
      %s161 = sphi 0, %s163
      %s164 = sphi 0, %s161
      %s165 = sphi 0, %s164
      %s181 = sphi 0, %s165
      %s191 = sphi 0, %s193
      %s194 = sphi 0, %s191
      %s195 = sphi 0, %s194
      %s211 = sphi 0, %s195
    $region4: #{tpu_custom_call.1} parent=1 // loop_header_branch
      %23 = sbr.rel (%p21) target = $region8
    $region5: #{tpu_custom_call.1} parent=1 // loop_body
      %s25 = ssub.s32 %s20, 1
      %s26 = ssub.s32 %s20, 2
      %s36 = sadd.s32 1, %s29
      %p37 = scmp.ge.s32.totalorder %s36, 1
      %s38 = scalar_select %p37, 0, %s36
      %s39 = sadd.s32 1, %s28
      %s40 = scalar_select %p37, %s39, %s28
      %p41 = scmp.ge.s32.totalorder %s40, 1
      %s42 = scalar_select %p41, 0, %s40
      %s43 = sadd.s32 1, %s27
      %s44 = scalar_select %p41, %s43, %s27
      %p45 = scmp.ge.s32.totalorder %s44, 2
      %s46 = scalar_select %p45, 0, %s44
      %s47 = ssub.s32 %s27, %s46
      %s48 = ssub.s32 %s29, %s38
      %s49 = sor.u32 %s47, %s48
      %p50 = scmp.eq.s32.totalorder %s49, 0
      %s52 = sadd.s32 %s51, 1
      %s53 = scalar_select %p50, %s51, %s52
      %p56 = pneg %p50
      %p57 = scmp.eq.s32.totalorder %s20, 1
      %p58 = por %p56, %p57
      %p59 = scmp.ne.s32.totalorder %s51, %s54
      %p60 = scmp.eq.s32.totalorder %s20, 0
      %p61 = por %p59, %p60
      %p62 = scmp.ne.s32.totalorder %s51, %s54
      %p63 = scmp.eq.s32.totalorder %s25, 1
      %p64 = por %p62, %p63
      %p65 = scmp.ne.s32.totalorder %s54, %s55
      %p66 = scmp.eq.s32.totalorder %s25, 0
      %p67 = por %p65, %p66
      %p68 = scmp.ne.s32.totalorder %s54, %s55
      %p69 = scmp.eq.s32.totalorder %s26, 1
      %p70 = por %p68, %p69
      %p72 = scmp.ne.s32.totalorder %s55, %s71
      %p73 = scmp.eq.s32.totalorder %s26, 0
      %p74 = por %p72, %p73
      %s75 = sadd.s32 %s29, 1
      %s76 = smul.u32 %s75, 3
      %s77 = sadd.s32 %s38, 1
      %s78 = smul.u32 %s77, 3
      %s79 = ssub.s32 %s27, %s46
      %s80 = ssub.s32 %s76, %s78
      %s81 = sor.u32 %s79, %s80
      %p82 = scmp.eq.s32.totalorder %s81, 0
      %s84 = sadd.s32 %s83, 1
      %s85 = scalar_select %p82, %s83, %s84
      %p88 = pneg %p82
      %p89 = scmp.eq.s32.totalorder %s20, 1
      %p90 = por %p88, %p89
      %p91 = scmp.ne.s32.totalorder %s83, %s86
      %p92 = scmp.eq.s32.totalorder %s20, 0
      %p93 = por %p91, %p92
      %p94 = scmp.ne.s32.totalorder %s83, %s86
      %p95 = scmp.eq.s32.totalorder %s25, 1
      %p96 = por %p94, %p95
      %p97 = scmp.ne.s32.totalorder %s86, %s87
      %p98 = scmp.eq.s32.totalorder %s25, 0
      %p99 = por %p97, %p98
      %p100 = scmp.ne.s32.totalorder %s86, %s87
      %p101 = scmp.eq.s32.totalorder %s26, 1
      %p102 = por %p100, %p101
      %p104 = scmp.ne.s32.totalorder %s87, %s103
      %p105 = scmp.eq.s32.totalorder %s26, 0
      %p106 = por %p104, %p105
      %s107 = ssub.s32 %s28, %s42
      %p108 = scmp.eq.s32.totalorder %s107, 0
      %s110 = sadd.s32 %s109, 1
      %s111 = scalar_select %p108, %s109, %s110
      %p114 = pneg %p108
      %p115 = scmp.eq.s32.totalorder %s20, 1
      %p116 = por %p114, %p115
      %p117 = scmp.ne.s32.totalorder %s109, %s112
      %p118 = scmp.eq.s32.totalorder %s20, 0
      %p119 = por %p117, %p118
      %p120 = scmp.ne.s32.totalorder %s109, %s112
      %p121 = scmp.eq.s32.totalorder %s25, 1
      %p122 = por %p120, %p121
      %p123 = scmp.ne.s32.totalorder %s112, %s113
      %p124 = scmp.eq.s32.totalorder %s25, 0
      %p125 = por %p123, %p124
      %p126 = scmp.ne.s32.totalorder %s112, %s113
      %p127 = scmp.eq.s32.totalorder %s26, 1
      %p128 = por %p126, %p127
      %p130 = scmp.ne.s32.totalorder %s113, %s129
      %p131 = scmp.eq.s32.totalorder %s26, 0
      %p132 = por %p130, %p131
      %s133 = ssub.s32 %s28, %s42
      %p134 = scmp.eq.s32.totalorder %s133, 0
      %s136 = sadd.s32 %s135, 1
      %s137 = scalar_select %p134, %s135, %s136
      %p140 = pneg %p134
      %p141 = scmp.eq.s32.totalorder %s20, 1
      %p142 = por %p140, %p141
      %p143 = scmp.ne.s32.totalorder %s135, %s138
      %p144 = scmp.eq.s32.totalorder %s20, 0
      %p145 = por %p143, %p144
      %p146 = scmp.ne.s32.totalorder %s135, %s138
      %p147 = scmp.eq.s32.totalorder %s25, 1
      %p148 = por %p146, %p147
      %p149 = scmp.ne.s32.totalorder %s138, %s139
      %p150 = scmp.eq.s32.totalorder %s25, 0
      %p151 = por %p149, %p150
      %p152 = scmp.ne.s32.totalorder %s138, %s139
      %p153 = scmp.eq.s32.totalorder %s26, 1
      %p154 = por %p152, %p153
      %p156 = scmp.ne.s32.totalorder %s139, %s155
      %p157 = scmp.eq.s32.totalorder %s26, 0
      %p158 = por %p156, %p157
      %s159 = ssub.s32 %s28, %s42
      %p160 = scmp.eq.s32.totalorder %s159, 0
      %s162 = sadd.s32 %s161, 1
      %s163 = scalar_select %p160, %s161, %s162
      %p166 = pneg %p160
      %p167 = scmp.eq.s32.totalorder %s20, 1
      %p168 = por %p166, %p167
      %p169 = scmp.ne.s32.totalorder %s161, %s164
      %p170 = scmp.eq.s32.totalorder %s20, 0
      %p171 = por %p169, %p170
      %p172 = scmp.ne.s32.totalorder %s161, %s164
      %p173 = scmp.eq.s32.totalorder %s25, 1
      %p174 = por %p172, %p173
      %p175 = scmp.ne.s32.totalorder %s164, %s165
      %p176 = scmp.eq.s32.totalorder %s25, 0
      %p177 = por %p175, %p176
      %p178 = scmp.ne.s32.totalorder %s164, %s165
      %p179 = scmp.eq.s32.totalorder %s26, 1
      %p180 = por %p178, %p179
      %p182 = scmp.ne.s32.totalorder %s165, %s181
      %p183 = scmp.eq.s32.totalorder %s26, 0
      %p184 = por %p182, %p183
      %s185 = ssub.s32 %s27, %s46
      %s186 = ssub.s32 %s28, %s42
      %s187 = sor.u32 %s185, %s186
      %s188 = ssub.s32 %s29, %s38
      %s189 = sor.u32 %s187, %s188
      %p190 = scmp.eq.s32.totalorder %s189, 0
      %s192 = sadd.s32 %s191, 1
      %s193 = scalar_select %p190, %s191, %s192
      %p196 = pneg %p190
      %p197 = scmp.eq.s32.totalorder %s20, 1
      %p198 = por %p196, %p197
      %p199 = scmp.ne.s32.totalorder %s191, %s194
      %p200 = scmp.eq.s32.totalorder %s20, 0
      %p201 = por %p199, %p200
      %p202 = scmp.ne.s32.totalorder %s191, %s194
      %p203 = scmp.eq.s32.totalorder %s25, 1
      %p204 = por %p202, %p203
      %p205 = scmp.ne.s32.totalorder %s194, %s195
      %p206 = scmp.eq.s32.totalorder %s25, 0
      %p207 = por %p205, %p206
      %p208 = scmp.ne.s32.totalorder %s194, %s195
      %p209 = scmp.eq.s32.totalorder %s26, 1
      %p210 = por %p208, %p209
      %p212 = scmp.ne.s32.totalorder %s195, %s211
      %p213 = scmp.eq.s32.totalorder %s26, 0
      %p214 = por %p212, %p213
      %p215 = scmp.le.s32.totalorder 1, %s20
      %p216 = scmp.lt.s32.totalorder %s20, 3
      %p217 = pnand %p215, %p216
      %p218 = pneg %p217
      // Predicated region
      $region9: #{tpu_custom_call.1} parent=5 // pred_check
        _
      $region10: #{tpu_custom_call.1} parent=5 // pred_check_branch
        %220 = sbr.rel (%p217) target = $region12
      $region11: #{tpu_custom_call.1} parent=5 // pred_region
        %s221 = ssub.s32 %s20, 1
        // Predicated region
        $region13: #{tpu_custom_call.1} parent=11 // pred_check
          %p222 = pneg %p125
        $region14: #{tpu_custom_call.1} parent=11 // pred_check_branch
          %224 = sbr.rel (%p222) target = $region16
        $region15: #{tpu_custom_call.1} parent=11 // pred_region
          %p225 = scmp.lt.s32.totalorder %s31, 0
          %s226 = scalar_select %p225, %s31, 0
          %s227 = smul.addr %s226, 2
          %s228 = smul.addr %s227, 4
          %s229 = scalar_lea.vmem %s2, %s228
        $region16: #{tpu_custom_call.1} parent=11 // pred_fallthru
          _
        // Predicated region
        $region17: #{tpu_custom_call.1} parent=11 // pred_check
          %p230 = pneg %p151
        $region18: #{tpu_custom_call.1} parent=11 // pred_check_branch
          %232 = sbr.rel (%p230) target = $region20
        $region19: #{tpu_custom_call.1} parent=11 // pred_region
          %p233 = scmp.lt.s32.totalorder %s31, 0
          %s234 = scalar_select %p233, %s31, 0
          %s235 = smul.addr %s234, 8
          %s236 = scalar_lea.vmem %s3, %s235
        $region20: #{tpu_custom_call.1} parent=11 // pred_fallthru
          _
        // Predicated region
        $region21: #{tpu_custom_call.1} parent=11 // pred_check
          %p237 = pneg %p177
        $region22: #{tpu_custom_call.1} parent=11 // pred_check_branch
          %239 = sbr.rel (%p237) target = $region24
        $region23: #{tpu_custom_call.1} parent=11 // pred_region
          %p240 = scmp.lt.s32.totalorder %s31, 0
          %s241 = scalar_select %p240, %s31, 0
          %s242 = smul.addr %s241, 8
          %s243 = scalar_lea.vmem %s4, %s242
        $region24: #{tpu_custom_call.1} parent=11 // pred_fallthru
          _
      $region12: #{tpu_custom_call.1} parent=5 // pred_fallthru
        _
      %p244 = scmp.lt.s32.totalorder %s20, 2
      // Predicated region
      $region25: #{tpu_custom_call.1} parent=5 // pred_check
        %p245 = pneg %p244
      $region26: #{tpu_custom_call.1} parent=5 // pred_check_branch
        %247 = sbr.rel (%p245) target = $region28
      $region27: #{tpu_custom_call.1} parent=5 // pred_region
        // Predicated region
        $region29: #{tpu_custom_call.1} parent=27 // pred_check
          %p248 = pneg %p61
        $region30: #{tpu_custom_call.1} parent=27 // pred_check_branch
          %250 = sbr.rel (%p248) target = $region32
        $region31: #{tpu_custom_call.1} parent=27 // pred_region
          %s251 = sand.u32 %s51, 1
          %s252 = scalar_lea.sflag [#allocation4], %s251
          %s253 = sand.u32 %s51, 1
          %s254 = smul.addr %s253, 24
          %s255 = scalar_lea.vmem [#allocation3], %s254
          %s256 = smul.u32 3, %s29
          %s257 = ssub.s32 5, %s256
          %p258 = scmp.lt.s32.totalorder %s257, 3
          %s259 = scalar_select %p258, %s257, 3
          %s260 = smul.u32 8, %s259
          %s261 = ssub.s32 24, %s260
          %s262 = sshll.u32 %s261, 4
          %263 = vsyncadd %s252, %s262
          %p264 = scmp.ne.s32.totalorder 0, %s260
          %s265 = smul.addr %s27, 10
          %s266 = sadd.s32 %s256, %s265
          %s267 = smul.addr %s266, 4
          %s268 = scalar_lea.hbm %s0, %s267
          %s269 = smul.u32 %s259, 4
          %s270 = smul.u32 %s269, 2
          %s271 = sshll.u32 %s268, 4
          %s272 = int_to_ptr.hbm [resolvable:$true] %s271
          %s273 = sshll.u32 %s255, 4
          %s274 = int_to_ptr.vmem [resolvable:$true] %s273
          %s275 = sshll.u32 %s270, 4
          %279 = dma.hbm_to_vmem [thread:$0]  (%p264), %s272, %s275, %s274, %s252, 320, 192, %s269
        $region32: #{tpu_custom_call.1} parent=27 // pred_fallthru
          _
        // Predicated region
        $region33: #{tpu_custom_call.1} parent=27 // pred_check
          %p280 = pneg %p93
        $region34: #{tpu_custom_call.1} parent=27 // pred_check_branch
          %282 = sbr.rel (%p280) target = $region36
        $region35: #{tpu_custom_call.1} parent=27 // pred_region
          %s283 = sand.u32 %s83, 1
          %s284 = scalar_lea.sflag [#allocation7], %s283
          %s285 = sand.u32 %s83, 1
          %s286 = smul.addr %s285, 8
          %s287 = scalar_lea.vmem [#allocation6], %s286
          %s288 = sadd.s32 %s29, 1
          %s289 = smul.u32 %s288, 3
          %291 = vsyncadd %s284, 0
          %s292 = smul.addr %s27, 10
          %s293 = sadd.s32 %s289, %s292
          %s294 = smul.addr %s293, 4
          %s295 = scalar_lea.hbm %s1, %s294
          %s296 = sshll.u32 %s295, 4
          %s297 = int_to_ptr.hbm [resolvable:$true] %s296
          %s298 = sshll.u32 %s287, 4
          %s299 = int_to_ptr.vmem [resolvable:$true] %s298
          %304 = dma.hbm_to_vmem [thread:$0]  %s297, 128, %s299, %s284, 320, 64, 4
        $region36: #{tpu_custom_call.1} parent=27 // pred_fallthru
          _
      $region28: #{tpu_custom_call.1} parent=5 // pred_fallthru
        _
      %p305 = scmp.le.s32.totalorder 1, %s20
      %p306 = scmp.lt.s32.totalorder %s20, 3
      %p307 = pnand %p305, %p306
      %p308 = pneg %p307
      // Predicated region
      $region37: #{tpu_custom_call.1} parent=5 // pred_check
        _
      $region38: #{tpu_custom_call.1} parent=5 // pred_check_branch
        %310 = sbr.rel (%p307) target = $region40
      $region39: #{tpu_custom_call.1} parent=5 // pred_region
        %s311 = ssub.s32 %s20, 1
        %s312 = sand.u32 %s54, 1
        %s313 = scalar_lea.sflag [#allocation4], %s312
        %s314 = sand.u32 %s54, 1
        %s315 = smul.addr %s314, 24
        %s316 = scalar_lea.vmem [#allocation3], %s315
        // Predicated region
        $region41: #{tpu_custom_call.1} parent=39 // pred_check
          %p317 = pneg %p67
        $region42: #{tpu_custom_call.1} parent=39 // pred_check_branch
          %319 = sbr.rel (%p317) target = $region44
        $region43: #{tpu_custom_call.1} parent=39 // pred_region
          %321 = dma.done %s313, 384
        $region44: #{tpu_custom_call.1} parent=39 // pred_fallthru
          _
        %s322 = sand.u32 %s86, 1
        %s323 = scalar_lea.sflag [#allocation7], %s322
        %s324 = sand.u32 %s86, 1
        %s325 = smul.addr %s324, 8
        %s326 = scalar_lea.vmem [#allocation6], %s325
        // Predicated region
        $region45: #{tpu_custom_call.1} parent=39 // pred_check
          %p327 = pneg %p99
        $region46: #{tpu_custom_call.1} parent=39 // pred_check_branch
          %329 = sbr.rel (%p327) target = $region48
        $region47: #{tpu_custom_call.1} parent=39 // pred_region
          %331 = dma.done %s323, 128
        $region48: #{tpu_custom_call.1} parent=39 // pred_fallthru
          _
        %s332 = sand.u32 %s54, 1
        %s333 = scalar_lea.sflag [#allocation4], %s332
        %s334 = sand.u32 %s54, 1
        %s335 = smul.addr %s334, 24
        %s336 = scalar_lea.vmem [#allocation3], %s335
        %p337 = pneg %p67
        %p338 = pneg %p64
        %s339 = sand.u32 %s86, 1
        %s340 = scalar_lea.sflag [#allocation7], %s339
        %s341 = sand.u32 %s86, 1
        %s342 = smul.addr %s341, 8
        %s343 = scalar_lea.vmem [#allocation6], %s342
        %p344 = pneg %p99
        %p345 = pneg %p96
        %p346 = scmp.lt.s32.totalorder %s31, 0
        %s347 = scalar_select %p346, %s31, 0
        %s348 = smul.addr %s347, 2
        %s349 = smul.addr %s348, 4
        %s350 = scalar_lea.vmem %s2, %s349
        %p351 = pneg %p125
        %p352 = pneg %p122
        %p353 = scmp.lt.s32.totalorder %s31, 0
        %s354 = scalar_select %p353, %s31, 0
        %s355 = smul.addr %s354, 8
        %s356 = scalar_lea.vmem %s3, %s355
        %p357 = pneg %p151
        %p358 = pneg %p148
        %p359 = scmp.lt.s32.totalorder %s31, 0
        %s360 = scalar_select %p359, %s31, 0
        %s361 = smul.addr %s360, 8
        %s362 = scalar_lea.vmem %s4, %s361
        %p363 = pneg %p177
        %p364 = pneg %p174
        %p365 = pneg %p207
        %p366 = pneg %p204
        %s367 = sand.u32 %s194, 1
        %s368 = scalar_lea.sflag [#allocation5], %s367
        %s369 = sand.u32 %s194, 1
        %s370 = smul.addr %s369, 24
        %s371 = scalar_lea.vmem [#allocation8], %s370
        %s372 = smul.u32 3, %s32
        %s373 = ssub.s32 5, %s372
        %p374 = scmp.lt.s32.totalorder %s373, 3
        %s375 = scalar_select %p374, %s373, 3
        %s376 = smul.u32 8, %s375
        %s377 = sadd.s32 %s32, 1
        %s378 = smul.u32 %s377, 3
        %p379 = scmp.lt.s32.totalorder %s31, 0
        %s380 = scalar_select %p379, %s31, 0
        %s381 = smul.addr %s380, 2
        %s382 = smul.addr %s381, 4
        %s383 = scalar_lea.vmem %s2, %s382
        %p384 = scmp.lt.s32.totalorder %s31, 0
        %s385 = scalar_select %p384, %s31, 0
        %s386 = smul.addr %s385, 8
        %s387 = scalar_lea.vmem %s3, %s386
        %p388 = scmp.lt.s32.totalorder %s31, 0
        %s389 = scalar_select %p388, %s31, 0
        %s390 = smul.addr %s389, 8
        %s391 = scalar_lea.vmem %s4, %s390
        %s392 = smul.u32 3, %s32
        %v394 = vld [vmem:[%s316] sm:$0xff]
        %v395 = vld [vmem:[%s316 + $0x8] sm:$0xf]
        %v396 = vld [vmem:[%s316 + $0xc] sm:$0xff]
        %v397 = vld [vmem:[%s316 + $0x14] sm:$0xf]
        %v398 = vld [vmem:[%s326] sm:$0xf]
        %v399 = vld [vmem:[%s326 + $0x4] sm:$0xf]
        %v404 = vunpack.c.l.b16 %v394
        %v405 = vunpack.c.h.b16 %v394
        %v406 = vunpack.c.l.b16 %v395
        %v407 = vunpack.c.l.b16 %v396
        %v408 = vunpack.c.h.b16 %v396
        %v409 = vunpack.c.l.b16 %v397
        %v412 = vunpack.c.l.b16 %v398
        %v413 = vunpack.c.l.b16 %v399
        %v414 = vpack.c.b16 %v405, %v404
        %v415 = vpack.c.b16 %v406, %v406
        %v416 = vpack.c.b16 %v408, %v407
        %v417 = vpack.c.b16 %v409, %v409
        %422 = vst [vmem:[#allocation2] sm:$0xff] %v414
        %423 = vst [vmem:[#allocation2 + $0x8] sm:$0xf] %v415
        %424 = vst [vmem:[#allocation2 + $0xc] sm:$0xff] %v416
        %425 = vst [vmem:[#allocation2 + $0x14] sm:$0xf] %v417
        %v426 = vpack.c.b16 %v412, %v406
        %v427 = vpack.c.b16 %v413, %v409
        %428 = vrot.lane.b32.xlu0 %v414, 127
        %v429 = vpop.permute.xlu0 %428
        %430 = vrot.lane.b32.xlu0 %v426, 127
        %v431 = vpop.permute.xlu0 %430
        %432 = vrot.lane.b32.xlu0 %v416, 127
        %v433 = vpop.permute.xlu0 %432
        %434 = vrot.lane.b32.xlu0 %v427, 127
        %v435 = vpop.permute.xlu0 %434
        %v436 = vrot.slane %v429, 4
        %v437 = vrot.slane %v431, 4
        %v438 = vrot.slane %v433, 4
        %v439 = vrot.slane %v435, 4
        %vm440 = vcmask 1043456
        %v441 = vsel %vm440, %v436, %v437
        %vm442 = vcmask 1039360
        %v443 = vsel %vm442, %v429, %v441
        %v444 = vsel %vm442, %v431, %v437
        %v445 = vsel %vm440, %v438, %v439
        %v446 = vsel %vm442, %v433, %v445
        %v447 = vsel %vm442, %v435, %v439
        %452 = vst [vmem:[#allocation2 + $0x18] sm:$0xff] %v443
        %453 = vst [vmem:[#allocation2 + $0x20] sm:$0xf] %v444
        %454 = vst [vmem:[#allocation2 + $0x24] sm:$0xff] %v446
        %455 = vst [vmem:[#allocation2 + $0x2c] sm:$0xf] %v447
        %456 = vrot.lane.b32.xlu0 %v414, 126
        %v457 = vpop.permute.xlu0 %456
        %458 = vrot.lane.b32.xlu0 %v426, 126
        %v459 = vpop.permute.xlu0 %458
        %460 = vrot.lane.b32.xlu0 %v416, 126
        %v461 = vpop.permute.xlu0 %460
        %462 = vrot.lane.b32.xlu0 %v427, 126
        %v463 = vpop.permute.xlu0 %462
        %v464 = vrot.slane %v457, 4
        %v465 = vrot.slane %v459, 4
        %v466 = vrot.slane %v461, 4
        %v467 = vrot.slane %v463, 4
        %v468 = vsel %vm440, %v464, %v465
        %vm469 = vcmask 1031168
        %v470 = vsel %vm469, %v457, %v468
        %v471 = vsel %vm469, %v459, %v465
        %v472 = vsel %vm440, %v466, %v467
        %v473 = vsel %vm469, %v461, %v472
        %v474 = vsel %vm469, %v463, %v467
        %479 = vst [vmem:[#allocation2 + $0x30] sm:$0xff] %v470
        %480 = vst [vmem:[#allocation2 + $0x38] sm:$0xf] %v471
        %481 = vst [vmem:[#allocation2 + $0x3c] sm:$0xff] %v473
        %482 = vst [vmem:[#allocation2 + $0x44] sm:$0xf] %v474
        %483 = vrot.lane.b32.xlu0 %v414, 110
        %v484 = vpop.permute.xlu0 %483
        %485 = vrot.lane.b32.xlu0 %v426, 110
        %v486 = vpop.permute.xlu0 %485
        %487 = vrot.lane.b32.xlu0 %v416, 110
        %v488 = vpop.permute.xlu0 %487
        %489 = vrot.lane.b32.xlu0 %v427, 110
        %v490 = vpop.permute.xlu0 %489
        %v491 = vrot.slane %v484, 4
        %v492 = vrot.slane %v486, 4
        %v493 = vrot.slane %v488, 4
        %v494 = vrot.slane %v490, 4
        %v495 = vsel %vm440, %v491, %v492
        %vm496 = vcmask 900096
        %v497 = vsel %vm496, %v484, %v495
        %v498 = vsel %vm496, %v486, %v492
        %v499 = vsel %vm440, %v493, %v494
        %v500 = vsel %vm496, %v488, %v499
        %v501 = vsel %vm496, %v490, %v494
        %506 = vst [vmem:[#allocation2 + $0x48] sm:$0xff] %v497
        %507 = vst [vmem:[#allocation2 + $0x50] sm:$0xf] %v498
        %508 = vst [vmem:[#allocation2 + $0x54] sm:$0xff] %v500
        %509 = vst [vmem:[#allocation2 + $0x5c] sm:$0xf] %v501
        %510 = vrot.lane.b32.xlu0 %v414, 109
        %v511 = vpop.permute.xlu0 %510
        %512 = vrot.lane.b32.xlu0 %v426, 109
        %v513 = vpop.permute.xlu0 %512
        %514 = vrot.lane.b32.xlu0 %v416, 109
        %v515 = vpop.permute.xlu0 %514
        %516 = vrot.lane.b32.xlu0 %v427, 109
        %v517 = vpop.permute.xlu0 %516
        %v518 = vrot.slane %v511, 4
        %v519 = vrot.slane %v513, 4
        %v520 = vrot.slane %v515, 4
        %v521 = vrot.slane %v517, 4
        %v522 = vsel %vm440, %v518, %v519
        %vm523 = vcmask 891904
        %v524 = vsel %vm523, %v511, %v522
        %v525 = vsel %vm523, %v513, %v519
        %v526 = vsel %vm440, %v520, %v521
        %v527 = vsel %vm523, %v515, %v526
        %v528 = vsel %vm523, %v517, %v521
        %533 = vst [vmem:[#allocation2 + $0x60] sm:$0xff] %v524
        %534 = vst [vmem:[#allocation2 + $0x68] sm:$0xf] %v525
        %535 = vst [vmem:[#allocation2 + $0x6c] sm:$0xff] %v527
        %536 = vst [vmem:[#allocation2 + $0x74] sm:$0xf] %v528
        %537 = vrot.lane.b32.xlu0 %v414, 108
        %v538 = vpop.permute.xlu0 %537
        %539 = vrot.lane.b32.xlu0 %v426, 108
        %v540 = vpop.permute.xlu0 %539
        %541 = vrot.lane.b32.xlu0 %v416, 108
        %v542 = vpop.permute.xlu0 %541
        %543 = vrot.lane.b32.xlu0 %v427, 108
        %v544 = vpop.permute.xlu0 %543
        %v545 = vrot.slane %v538, 4
        %v546 = vrot.slane %v540, 4
        %v547 = vrot.slane %v542, 4
        %v548 = vrot.slane %v544, 4
        %v549 = vsel %vm440, %v545, %v546
        %vm550 = vcmask 883712
        %v551 = vsel %vm550, %v538, %v549
        %v552 = vsel %vm550, %v540, %v546
        %v553 = vsel %vm440, %v547, %v548
        %v554 = vsel %vm550, %v542, %v553
        %v555 = vsel %vm550, %v544, %v548
        %560 = vst [vmem:[#allocation2 + $0x78] sm:$0xff] %v551
        %561 = vst [vmem:[#allocation2 + $0x80] sm:$0xf] %v552
        %562 = vst [vmem:[#allocation2 + $0x84] sm:$0xff] %v554
        %563 = vst [vmem:[#allocation2 + $0x8c] sm:$0xf] %v555
        %564 = vrot.lane.b32.xlu0 %v414, 92
        %v565 = vpop.permute.xlu0 %564
        %566 = vrot.lane.b32.xlu0 %v426, 92
        %v567 = vpop.permute.xlu0 %566
        %568 = vrot.lane.b32.xlu0 %v416, 92
        %v569 = vpop.permute.xlu0 %568
        %570 = vrot.lane.b32.xlu0 %v427, 92
        %v571 = vpop.permute.xlu0 %570
        %v572 = vrot.slane %v565, 4
        %v573 = vrot.slane %v567, 4
        %v574 = vrot.slane %v569, 4
        %v575 = vrot.slane %v571, 4
        %v576 = vsel %vm440, %v572, %v573
        %vm577 = vcmask 752640
        %v578 = vsel %vm577, %v565, %v576
        %v579 = vsel %vm577, %v567, %v573
        %v580 = vsel %vm440, %v574, %v575
        %v581 = vsel %vm577, %v569, %v580
        %v582 = vsel %vm577, %v571, %v575
        %587 = vst [vmem:[#allocation2 + $0x90] sm:$0xff] %v578
        %588 = vst [vmem:[#allocation2 + $0x98] sm:$0xf] %v579
        %589 = vst [vmem:[#allocation2 + $0x9c] sm:$0xff] %v581
        %590 = vst [vmem:[#allocation2 + $0xa4] sm:$0xf] %v582
        %591 = vrot.lane.b32.xlu0 %v414, 91
        %v592 = vpop.permute.xlu0 %591
        %593 = vrot.lane.b32.xlu0 %v426, 91
        %v594 = vpop.permute.xlu0 %593
        %595 = vrot.lane.b32.xlu0 %v416, 91
        %v596 = vpop.permute.xlu0 %595
        %597 = vrot.lane.b32.xlu0 %v427, 91
        %v598 = vpop.permute.xlu0 %597
        %v599 = vrot.slane %v592, 4
        %v600 = vrot.slane %v594, 4
        %v601 = vrot.slane %v596, 4
        %v602 = vrot.slane %v598, 4
        %v603 = vsel %vm440, %v599, %v600
        %vm604 = vcmask 744448
        %v605 = vsel %vm604, %v592, %v603
        %v606 = vsel %vm604, %v594, %v600
        %v607 = vsel %vm440, %v601, %v602
        %v608 = vsel %vm604, %v596, %v607
        %v609 = vsel %vm604, %v598, %v602
        %614 = vst [vmem:[#allocation2 + $0xa8] sm:$0xff] %v605
        %615 = vst [vmem:[#allocation2 + $0xb0] sm:$0xf] %v606
        %616 = vst [vmem:[#allocation2 + $0xb4] sm:$0xff] %v608
        %617 = vst [vmem:[#allocation2 + $0xbc] sm:$0xf] %v609
        %618 = vrot.lane.b32.xlu0 %v414, 90
        %v619 = vpop.permute.xlu0 %618
        %620 = vrot.lane.b32.xlu0 %v426, 90
        %v621 = vpop.permute.xlu0 %620
        %622 = vrot.lane.b32.xlu0 %v416, 90
        %v623 = vpop.permute.xlu0 %622
        %624 = vrot.lane.b32.xlu0 %v427, 90
        %v625 = vpop.permute.xlu0 %624
        %v626 = vrot.slane %v619, 4
        %v627 = vrot.slane %v621, 4
        %v628 = vrot.slane %v623, 4
        %v629 = vrot.slane %v625, 4
        %v630 = vsel %vm440, %v626, %v627
        %vm631 = vcmask 736256
        %v632 = vsel %vm631, %v619, %v630
        %v633 = vsel %vm631, %v621, %v627
        %v634 = vsel %vm440, %v628, %v629
        %v635 = vsel %vm631, %v623, %v634
        %v636 = vsel %vm631, %v625, %v629
        %641 = vst [vmem:[#allocation2 + $0xc0] sm:$0xff] %v632
        %642 = vst [vmem:[#allocation2 + $0xc8] sm:$0xf] %v633
        %643 = vst [vmem:[#allocation2 + $0xcc] sm:$0xff] %v635
        %644 = vst [vmem:[#allocation2 + $0xd4] sm:$0xf] %v636
        %v645 = vld [vmem:[%s383] sm:$0xff]
        %v646 = vld [vmem:[#allocation2] sm:$0xff]
        %v647 = vld [vmem:[#allocation2 + $0x8] sm:$0xf]
        %v648 = vld [vmem:[#allocation2 + $0xc] sm:$0xff]
        %v649 = vld [vmem:[#allocation2 + $0x14] sm:$0xf]
        %v650 = vld [vmem:[#allocation2 + $0x18] sm:$0xff]
        %v651 = vld [vmem:[#allocation2 + $0x20] sm:$0xf]
        %v652 = vld [vmem:[#allocation2 + $0x24] sm:$0xff]
        %v653 = vld [vmem:[#allocation2 + $0x2c] sm:$0xf]
        %v654 = vld [vmem:[#allocation2 + $0x30] sm:$0xff]
        %v655 = vld [vmem:[#allocation2 + $0x38] sm:$0xf]
        %v656 = vld [vmem:[#allocation2 + $0x3c] sm:$0xff]
        %v657 = vld [vmem:[#allocation2 + $0x44] sm:$0xf]
        %v658 = vld [vmem:[#allocation2 + $0x48] sm:$0xff]
        %v659 = vld [vmem:[#allocation2 + $0x50] sm:$0xf]
        %v660 = vld [vmem:[#allocation2 + $0x54] sm:$0xff]
        %v661 = vld [vmem:[#allocation2 + $0x5c] sm:$0xf]
        %v662 = vld [vmem:[#allocation2 + $0x60] sm:$0xff]
        %v663 = vld [vmem:[#allocation2 + $0x68] sm:$0xf]
        %v664 = vld [vmem:[#allocation2 + $0x6c] sm:$0xff]
        %v665 = vld [vmem:[#allocation2 + $0x74] sm:$0xf]
        %v666 = vld [vmem:[#allocation2 + $0x78] sm:$0xff]
        %v667 = vld [vmem:[#allocation2 + $0x80] sm:$0xf]
        %v668 = vld [vmem:[#allocation2 + $0x84] sm:$0xff]
        %v669 = vld [vmem:[#allocation2 + $0x8c] sm:$0xf]
        %v670 = vld [vmem:[#allocation2 + $0x90] sm:$0xff]
        %v671 = vld [vmem:[#allocation2 + $0x98] sm:$0xf]
        %v672 = vld [vmem:[#allocation2 + $0x9c] sm:$0xff]
        %v673 = vld [vmem:[#allocation2 + $0xa4] sm:$0xf]
        %v674 = vld [vmem:[#allocation2 + $0xa8] sm:$0xff]
        %v675 = vld [vmem:[#allocation2 + $0xb0] sm:$0xf]
        %v676 = vld [vmem:[#allocation2 + $0xb4] sm:$0xff]
        %v677 = vld [vmem:[#allocation2 + $0xbc] sm:$0xf]
        %v678 = vld [vmem:[#allocation2 + $0xc0] sm:$0xff]
        %v679 = vld [vmem:[#allocation2 + $0xc8] sm:$0xf]
        %v680 = vld [vmem:[#allocation2 + $0xcc] sm:$0xff]
        %v681 = vld [vmem:[#allocation2 + $0xd4] sm:$0xf]
        %v683 = vunpack.c.l.b16 %v645
        %v684 = vunpack.c.h.b16 %v645
        %v685 = vpack.c.b16 %v683, %v683
        %v686 = vpack.c.b16 %v684, %v684
        %v724 = vunpack.c.l.b16 %v646
        %v725 = vunpack.c.h.b16 %v646
        %v726 = vunpack.c.l.b16 %v647
        %v727 = vunpack.c.l.b16 %v648
        %v728 = vunpack.c.h.b16 %v648
        %v729 = vunpack.c.l.b16 %v649
        %v730 = vunpack.c.l.b16 %v650
        %v731 = vunpack.c.h.b16 %v650
        %v732 = vunpack.c.l.b16 %v651
        %v733 = vunpack.c.l.b16 %v652
        %v734 = vunpack.c.h.b16 %v652
        %v735 = vunpack.c.l.b16 %v653
        %v736 = vunpack.c.l.b16 %v654
        %v737 = vunpack.c.h.b16 %v654
        %v738 = vunpack.c.l.b16 %v655
        %v739 = vunpack.c.l.b16 %v656
        %v740 = vunpack.c.h.b16 %v656
        %v741 = vunpack.c.l.b16 %v657
        %v742 = vunpack.c.l.b16 %v658
        %v743 = vunpack.c.h.b16 %v658
        %v744 = vunpack.c.l.b16 %v659
        %v745 = vunpack.c.l.b16 %v660
        %v746 = vunpack.c.h.b16 %v660
        %v747 = vunpack.c.l.b16 %v661
        %v748 = vunpack.c.l.b16 %v662
        %v749 = vunpack.c.h.b16 %v662
        %v750 = vunpack.c.l.b16 %v663
        %v751 = vunpack.c.l.b16 %v664
        %v752 = vunpack.c.h.b16 %v664
        %v753 = vunpack.c.l.b16 %v665
        %v754 = vunpack.c.l.b16 %v666
        %v755 = vunpack.c.h.b16 %v666
        %v756 = vunpack.c.l.b16 %v667
        %v757 = vunpack.c.l.b16 %v668
        %v758 = vunpack.c.h.b16 %v668
        %v759 = vunpack.c.l.b16 %v669
        %v760 = vunpack.c.l.b16 %v670
        %v761 = vunpack.c.h.b16 %v670
        %v762 = vunpack.c.l.b16 %v671
        %v763 = vunpack.c.l.b16 %v672
        %v764 = vunpack.c.h.b16 %v672
        %v765 = vunpack.c.l.b16 %v673
        %v766 = vunpack.c.l.b16 %v674
        %v767 = vunpack.c.h.b16 %v674
        %v768 = vunpack.c.l.b16 %v675
        %v769 = vunpack.c.l.b16 %v676
        %v770 = vunpack.c.h.b16 %v676
        %v771 = vunpack.c.l.b16 %v677
        %v772 = vunpack.c.l.b16 %v678
        %v773 = vunpack.c.h.b16 %v678
        %v774 = vunpack.c.l.b16 %v679
        %v775 = vunpack.c.l.b16 %v680
        %v776 = vunpack.c.h.b16 %v680
        %v777 = vunpack.c.l.b16 %v681
        %v778 = vpack.c.b16 %v727, %v724
        %v779 = vpack.c.b16 %v728, %v725
        %v780 = vpack.c.b16 %v729, %v726
        %v781 = vpack.c.b16 %v733, %v730
        %v782 = vpack.c.b16 %v734, %v731
        %v783 = vpack.c.b16 %v735, %v732
        %v784 = vpack.c.b16 %v739, %v736
        %v785 = vpack.c.b16 %v740, %v737
        %v786 = vpack.c.b16 %v741, %v738
        %v787 = vpack.c.b16 %v745, %v742
        %v788 = vpack.c.b16 %v746, %v743
        %v789 = vpack.c.b16 %v747, %v744
        %v790 = vpack.c.b16 %v751, %v748
        %v791 = vpack.c.b16 %v752, %v749
        %v792 = vpack.c.b16 %v753, %v750
        %v793 = vpack.c.b16 %v757, %v754
        %v794 = vpack.c.b16 %v758, %v755
        %v795 = vpack.c.b16 %v759, %v756
        %v796 = vpack.c.b16 %v763, %v760
        %v797 = vpack.c.b16 %v764, %v761
        %v798 = vpack.c.b16 %v765, %v762
        %v799 = vpack.c.b16 %v769, %v766
        %v800 = vpack.c.b16 %v770, %v767
        %v801 = vpack.c.b16 %v771, %v768
        %v802 = vpack.c.b16 %v775, %v772
        %v803 = vpack.c.b16 %v776, %v773
        %v804 = vpack.c.b16 %v777, %v774
        %vm832 = vcmask 130048
        %v834 = vsel %vm832, %v686, 0
        %836 = vmatpush.bf16.msra.mxu0 %v799
        %837 = vmatpush.bf16.msra.mxu0 %v796
        %838 = vmatpush.bf16.msra.mxu0 %v793
        %839 = vmatpush.bf16.msra.mxu0 %v790
        %840 = vmatpush.bf16.msra.mxu0 %v787
        %841 = vmatpush.bf16.msra.mxu0 %v784
        %842 = vmatpush.bf16.msra.mxu0 %v781
        %843 = vmatpush.bf16.msra.mxu0 %v778
        %844 = vmatmul.bf16.gmra.mxu0 %v685
        %v845 = vpop.f32.mrf.mxu0
        %v846 = vadd.f32 0.0, %v845
        %v847 = vpop.f32.mrf.mxu0
        %848 = vdwg.mxu0
        %849 = vmatpush.bf16.msra.mxu0 0
        %850 = vmatpush.bf16.msra.mxu0 0
        %851 = vmatpush.bf16.msra.mxu0 0
        %852 = vmatpush.bf16.msra.mxu0 0
        %853 = vmatpush.bf16.msra.mxu0 0
        %854 = vmatpush.bf16.msra.mxu0 0
        %855 = vmatpush.bf16.msra.mxu0 0
        %856 = vmatpush.bf16.msra.mxu0 %v802
        %857 = vmatmul.bf16.gmra.mxu0 %v834
        %v858 = vpop.f32.mrf.mxu0
        %v859 = vadd.f32 %v846, %v858
        %v860 = vpop.f32.mrf.mxu0
        %861 = vdwg.mxu0
        %862 = vmatpush.bf16.msra.mxu0 %v800
        %863 = vmatpush.bf16.msra.mxu0 %v797
        %864 = vmatpush.bf16.msra.mxu0 %v794
        %865 = vmatpush.bf16.msra.mxu0 %v791
        %866 = vmatpush.bf16.msra.mxu0 %v788
        %867 = vmatpush.bf16.msra.mxu0 %v785
        %868 = vmatpush.bf16.msra.mxu0 %v782
        %869 = vmatpush.bf16.msra.mxu0 %v779
        %870 = vmatmul.bf16.gmra.mxu0 %v685
        %v871 = vpop.f32.mrf.mxu0
        %v872 = vadd.f32 0.0, %v871
        %v873 = vpop.f32.mrf.mxu0
        %874 = vdwg.mxu0
        %875 = vmatpush.bf16.msra.mxu0 0
        %876 = vmatpush.bf16.msra.mxu0 0
        %877 = vmatpush.bf16.msra.mxu0 0
        %878 = vmatpush.bf16.msra.mxu0 0
        %879 = vmatpush.bf16.msra.mxu0 0
        %880 = vmatpush.bf16.msra.mxu0 0
        %881 = vmatpush.bf16.msra.mxu0 0
        %882 = vmatpush.bf16.msra.mxu0 %v803
        %883 = vmatmul.bf16.gmra.mxu0 %v834
        %v884 = vpop.f32.mrf.mxu0
        %v885 = vadd.f32 %v872, %v884
        %v886 = vpop.f32.mrf.mxu0
        %887 = vdwg.mxu0
        %888 = vmatpush.bf16.msra.mxu0 %v801
        %889 = vmatpush.bf16.msra.mxu0 %v798
        %890 = vmatpush.bf16.msra.mxu0 %v795
        %891 = vmatpush.bf16.msra.mxu0 %v792
        %892 = vmatpush.bf16.msra.mxu0 %v789
        %893 = vmatpush.bf16.msra.mxu0 %v786
        %894 = vmatpush.bf16.msra.mxu0 %v783
        %895 = vmatpush.bf16.msra.mxu0 %v780
        %896 = vmatmul.bf16.gmra.mxu0 %v685
        %v897 = vpop.f32.mrf.mxu0
        %v898 = vadd.f32 0.0, %v897
        %v899 = vpop.f32.mrf.mxu0
        %900 = vdwg.mxu0
        %901 = vmatpush.bf16.msra.mxu0 0
        %902 = vmatpush.bf16.msra.mxu0 0
        %903 = vmatpush.bf16.msra.mxu0 0
        %904 = vmatpush.bf16.msra.mxu0 0
        %905 = vmatpush.bf16.msra.mxu0 0
        %906 = vmatpush.bf16.msra.mxu0 0
        %907 = vmatpush.bf16.msra.mxu0 0
        %908 = vmatpush.bf16.msra.mxu0 %v804
        %909 = vmatmul.bf16.gmra.mxu0 %v834
        %v910 = vpop.f32.mrf.mxu0
        %v911 = vadd.f32 %v898, %v910
        %v912 = vpop.f32.mrf.mxu0
        %913 = vdwg.mxu0
        %v914 = vld [vmem:[%s387] sm:$0xff]
        %916 = vset.pattern.permute.xlu0 0
        %917 = vperm.xlu0 %916, %v914
        %v918 = vpop.permute.xlu0 %917
        %v920 = vmul.f32 %v859, %v918
        %v921 = vmul.f32 %v885, %v918
        %v922 = vmul.f32 %v911, %v918
        %v923 = vld [vmem:[%s391] sm:$0xff]
        %925 = vset.pattern.permute.xlu0 0
        %926 = vperm.xlu0 %925, %v923
        %v927 = vpop.permute.xlu0 %926
        %v929 = vadd.f32 %v920, %v927
        %v930 = vadd.f32 %v921, %v927
        %v931 = vadd.f32 %v922, %v927
        %v932 = vmax.f32 %v929, 0.0
        %v933 = vmax.f32 %v930, 0.0
        %v934 = vmax.f32 %v931, 0.0
        %935 = vst [vmem:[%s371] sm:$0xff] %v932
        %936 = vst [vmem:[%s371 + $0x8] sm:$0xff] %v933
        %937 = vst [vmem:[%s371 + $0x10] sm:$0xff] %v934
        %s938 = sand.u32 %s194, 1
        %s939 = scalar_lea.sflag [#allocation5], %s938
        %s940 = sand.u32 %s194, 1
        %s941 = smul.addr %s940, 24
        %s942 = scalar_lea.vmem [#allocation8], %s941
        // Predicated region
        $region49: #{tpu_custom_call.1} parent=39 // pred_check
          %p943 = pneg %p204
        $region50: #{tpu_custom_call.1} parent=39 // pred_check_branch
          %945 = sbr.rel (%p943) target = $region52
        $region51: #{tpu_custom_call.1} parent=39 // pred_region
          %s946 = smul.u32 3, %s32
          %948 = vsyncadd %s939, 0
          %s949 = smul.addr %s31, 3
          %s950 = sadd.s32 %s946, %s949
          %s951 = smul.addr %s30, 3
          %s952 = sadd.s32 %s950, %s951
          %s953 = smul.addr %s952, 8
          %s954 = scalar_lea.hbm %s5, %s953
          %s956 = sshll.u32 %s942, 4
          %s957 = int_to_ptr.vmem [resolvable:$true] %s956
          %s958 = sshll.u32 %s954, 4
          %s959 = int_to_ptr.hbm [resolvable:$true] %s958
          %961 = dma.vmem_to_hbm [thread:$0]  %s957, 384, %s959, %s939
        $region52: #{tpu_custom_call.1} parent=39 // pred_fallthru
          _
      $region40: #{tpu_custom_call.1} parent=5 // pred_fallthru
        _
      %p962 = scmp.le.s32.totalorder 2, %s20
      // Predicated region
      $region53: #{tpu_custom_call.1} parent=5 // pred_check
        %p963 = pneg %p962
      $region54: #{tpu_custom_call.1} parent=5 // pred_check_branch
        %965 = sbr.rel (%p963) target = $region56
      $region55: #{tpu_custom_call.1} parent=5 // pred_region
        %s966 = ssub.s32 %s20, 2
        // Predicated region
        $region57: #{tpu_custom_call.1} parent=55 // pred_check
          %p967 = pneg %p210
        $region58: #{tpu_custom_call.1} parent=55 // pred_check_branch
          %969 = sbr.rel (%p967) target = $region60
        $region59: #{tpu_custom_call.1} parent=55 // pred_region
          %s970 = sand.u32 %s195, 1
          %s971 = scalar_lea.sflag [#allocation5], %s970
          %s972 = sand.u32 %s195, 1
          %s973 = smul.addr %s972, 24
          %s974 = scalar_lea.vmem [#allocation8], %s973
          %976 = dma.done %s971, 384
        $region60: #{tpu_custom_call.1} parent=55 // pred_fallthru
          _
      $region56: #{tpu_custom_call.1} parent=5 // pred_fallthru
        _
    $region6: #{tpu_custom_call.1} parent=1 // loop_footer
      %s24 = sadd.s32 1, %s20
    $region7: #{tpu_custom_call.1} parent=1 // loop_footer_branch
      %19 = sbr.rel target = $region3
    $region8: #{tpu_custom_call.1} parent=1 // loop_exit
      _
    %977 = vsyncpa [#allocation4], 1
    %s978 = scalar_lea.sflag [#allocation4], 1
    %979 = vsyncpa %s978, 1
    %980 = vsyncpa [#allocation7], 1
    %s981 = scalar_lea.sflag [#allocation7], 1
    %982 = vsyncpa %s981, 1
    %983 = vsyncpa [#allocation5], 1
    %s984 = scalar_lea.sflag [#allocation5], 1
    %985 = vsyncpa %s984, 1

</llo_original>
